<compile_context>
chip_gen: v7x
topology: tpu7x:2x2x1
jax: 0.10.0
libtpu: 0.0.40
codegen_flags: <defaults>
</compile_context>

<pallas_src>
import functools

import jax
import jax.numpy as jnp
from jax import lax
from jax.experimental import pallas as pl
from jax.experimental.pallas import tpu as pltpu

_INV_SQRT2 = 0.7071067811865476
_SQRT_2_OVER_PI = 0.7978845608028654


def _round_up(x: int, m: int) -> int:
    return (x + m - 1) // m * m


# --------------------------------------------------------------------------------------
# Kernels
# --------------------------------------------------------------------------------------
def _gelu(h, tanh_approx: bool):
    if tanh_approx:
        # tanh lowers to the EUP slot (essentially free next to the MXU); cheaper than
        # the erf polynomial on the VPU.  Matches nn.GELU(approximate='tanh').
        return 0.5 * h * (1.0 + jnp.tanh(_SQRT_2_OVER_PI * (h + 0.044715 * h * h * h)))
    # Exact GELU: 0.5*x*(1+erf(x/sqrt(2))) — matches nn.GELU() default.
    return 0.5 * h * (1.0 + lax.erf(h * _INV_SQRT2))


def _mlp_kernel_resident(x_ref, w1_ref, b1_ref, w2_ref, b2_ref, o_ref, *, gelu_tanh):
    # Weights fully VMEM-resident (block index constant across the grid) -> single
    # fc1 + GELU + fc2 pass per row tile, output written directly (no accumulator).
    h = jnp.dot(x_ref[...], w1_ref[...], preferred_element_type=jnp.float32)
    h = _gelu(h + b1_ref[...], gelu_tanh)
    out = jnp.dot(h.astype(w2_ref.dtype), w2_ref[...], preferred_element_type=jnp.float32)
    o_ref[...] = (out + b2_ref[...]).astype(o_ref.dtype)


def _mlp_kernel_streamed(x_ref, w1_ref, b1_ref, w2_ref, b2_ref, o_ref, acc_ref, *,
                         gelu_tanh):
    # Hidden dim streamed in slabs; f32 accumulator resident across the hidden axis.
    k = pl.program_id(1)

    @pl.when(k == 0)
    def _init():
        acc_ref[...] = jnp.zeros_like(acc_ref)

    h = jnp.dot(x_ref[...], w1_ref[...], preferred_element_type=jnp.float32)
    h = _gelu(h + b1_ref[...], gelu_tanh)
    acc_ref[...] += jnp.dot(h.astype(w2_ref.dtype), w2_ref[...],
                            preferred_element_type=jnp.float32)

    @pl.when(k == pl.num_programs(1) - 1)
    def _finalize():
        o_ref[...] = (acc_ref[...] + b2_ref[...]).astype(o_ref.dtype)


# --------------------------------------------------------------------------------------
# Tiling / VMEM budget selection
# --------------------------------------------------------------------------------------
def _vmem_footprint(tile_n, tile_h, in_p, out_p, isz, osz, streamed):
    f = 2 * tile_n * in_p * isz          # x block (double buffered)
    f += 2 * in_p * tile_h * isz         # w1 block
    f += 2 * tile_h * out_p * isz        # w2 block
    f += 2 * tile_h * 4 + 2 * out_p * 4  # biases (f32)
    f += 2 * tile_n * out_p * osz        # out block
    f += tile_n * tile_h * 4             # live f32 h intermediate
    if streamed:
        f += tile_n * out_p * 4          # f32 accumulator scratch
    return f


def _largest_aligned_divisor(hid_p: int, req: int) -> int:
    """Largest multiple of 128 that divides hid_p and is <= req (>= 128)."""
    req = max(128, min(_round_up(req, 128), hid_p))
    best = 128
    for cand in range(128, req + 1, 128):
        if hid_p % cand == 0:
            best = cand
    return best


def _select_config(n, in_p, hid_p, out_p, isz, osz, tile_n_req, tile_h_req):
    try:
        vmem_cap = int(pltpu.get_tpu_info().vmem_capacity_bytes)
    except Exception:
        vmem_cap = 64 << 20  # conservative (v7x-sized) fallback
    budget = max(vmem_cap - (12 << 20), 24 << 20)  # headroom for Mosaic scratch/spills

    n128 = _round_up(max(n, 1), 128)
    if tile_n_req is None:
        # Roofline balance points: v5e/v6e (128 MiB VMEM) want ~650-1000 rows; v7x
        # (64 MiB VMEM, 3.2 TB/s HBM) only needs ~384-512.
        tile_n_req = 1024 if vmem_cap >= (96 << 20) else 512
    tile_n = max(128, min(_round_up(tile_n_req, 128), n128))
    # Keep >=2 row tiles when there are enough rows so both TCs of a dual-core chip
    # (v7x) get work on the "parallel" row axis.
    if tile_n >= n128 and n128 >= 256:
        tile_n = max(128, _round_up(n128 // 2, 128))

    def fits(t_n, t_h, streamed):
        return _vmem_footprint(t_n, t_h, in_p, out_p, isz, osz, streamed) <= budget

    # Only force the streamed path when the caller explicitly asked for tile_h < hid_p.
    force_streamed = (tile_h_req is not None
                      and _round_up(tile_h_req, 128) < hid_p)

    if not force_streamed:
        t_n = tile_n
        while t_n > 128 and not fits(t_n, hid_p, False):
            t_n -= 128
        if fits(t_n, hid_p, False):
            return t_n, hid_p, False, vmem_cap

    # Streamed fallback: biggest hidden slab (multiple of 128 dividing hid_p) <= request.
    t_h = _largest_aligned_divisor(hid_p, tile_h_req if tile_h_req else 2048)
    t_n = tile_n
    while t_n > 128 and not fits(t_n, t_h, True):
        t_n -= 128
    while t_h > 128 and not fits(t_n, t_h, True):
        t_h = _largest_aligned_divisor(hid_p, t_h - 128)
    return t_n, t_h, True, vmem_cap


def _pad_cast(a, rows, cols, dtype):
    """Pad to (rows, cols) and cast, skipping both when already in the target form."""
    r, c = a.shape
    if (r, c) != (rows, cols):
        a = jnp.pad(a, ((0, rows - r), (0, cols - c)))
    if a.dtype != dtype:
        a = a.astype(dtype)
    return a


# --------------------------------------------------------------------------------------
# Forward wrapper
# --------------------------------------------------------------------------------------
@functools.partial(jax.jit, static_argnames=(
    "tile_n", "tile_h", "compute_dtype", "out_dtype", "gelu_tanh_approx"))
def mlp_forward(x, w1, b1, w2, b2, *, tile_n=None, tile_h=None,
                compute_dtype=jnp.bfloat16, out_dtype=None,
                gelu_tanh_approx=False):
    """x: [batch, seq, in_dim] -> [batch, seq, out_dim].

    w1: [in_dim, hidden], b1: [1, hidden] (or [hidden]),
    w2: [hidden, out_dim], b2: [1, out_dim] (or [out_dim]).
    tile_n/tile_h=None -> auto-select from the chip's VMEM capacity.
    """
    batch, seq, in_dim = x.shape
    hidden = w1.shape[1]
    out_dim = w2.shape[1]
    n = batch * seq
    out_dtype = x.dtype if out_dtype is None else out_dtype

    # Lane-dense (multiple-of-128) feature dims.
    in_p = _round_up(in_dim, 128)
    hid_p = _round_up(hidden, 128)
    out_p = _round_up(out_dim, 128)

    isz = jnp.dtype(compute_dtype).itemsize
    osz = jnp.dtype(out_dtype).itemsize

    tile_n, tile_h, streamed, vmem_cap = _select_config(
        n, in_p, hid_p, out_p, isz, osz, tile_n, tile_h)
    n_pad = _round_up(max(n, 1), tile_n)

    # Zero padding is exact: gelu(0)=0 and padded weight rows/cols are 0.
    # (For production, keep weights pre-padded/pre-cast outside the step so these are
    # no-ops every call.)
    x2d = _pad_cast(x.reshape(n, in_dim), n_pad, in_p, compute_dtype)
    w1_p = _pad_cast(w1, in_p, hid_p, compute_dtype)
    w2_p = _pad_cast(w2, hid_p, out_p, compute_dtype)
    b1_p = _pad_cast(b1.reshape(1, -1), 1, hid_p, jnp.float32)
    b2_p = _pad_cast(b2.reshape(1, -1), 1, out_p, jnp.float32)

    # VMEM limit: sized from the actual block footprint, clamped to chip capacity.
    fp = _vmem_footprint(tile_n, tile_h, in_p, out_p, isz, osz, streamed)
    vmem_limit = max(32 << 20, int(fp * 1.25) + (8 << 20))
    vmem_limit = int(min(vmem_limit, vmem_cap - (2 << 20)))

    if streamed:
        kernel = functools.partial(_mlp_kernel_streamed, gelu_tanh=gelu_tanh_approx)
        out2d = pl.pallas_call(
            kernel,
            out_shape=jax.ShapeDtypeStruct((n_pad, out_p), out_dtype),
            grid_spec=pltpu.PrefetchScalarGridSpec(
                num_scalar_prefetch=0,
                grid=(n_pad // tile_n, hid_p // tile_h),   # reduction (hidden) axis last
                in_specs=[
                    pl.BlockSpec((tile_n, in_p), lambda i, k: (i, 0)),
                    pl.BlockSpec((in_p, tile_h), lambda i, k: (0, k)),
                    pl.BlockSpec((1, tile_h), lambda i, k: (0, k)),
                    pl.BlockSpec((tile_h, out_p), lambda i, k: (k, 0)),
                    pl.BlockSpec((1, out_p), lambda i, k: (0, 0)),
                ],
                out_specs=pl.BlockSpec((tile_n, out_p), lambda i, k: (i, 0)),
                scratch_shapes=[pltpu.VMEM((tile_n, out_p), jnp.float32)],
            ),
            compiler_params=pltpu.CompilerParams(
                dimension_semantics=("parallel", "arbitrary"),
                vmem_limit_bytes=vmem_limit,
            ),
        )(x2d, w1_p, b1_p, w2_p, b2_p)
    else:
        kernel = functools.partial(_mlp_kernel_resident, gelu_tanh=gelu_tanh_approx)
        out2d = pl.pallas_call(
            kernel,
            out_shape=jax.ShapeDtypeStruct((n_pad, out_p), out_dtype),
            grid_spec=pltpu.PrefetchScalarGridSpec(
                num_scalar_prefetch=0,
                grid=(n_pad // tile_n,),
                in_specs=[
                    pl.BlockSpec((tile_n, in_p), lambda i: (i, 0)),
                    # Constant block indices -> weights fetched from HBM once, resident.
                    pl.BlockSpec((in_p, hid_p), lambda i: (0, 0)),
                    pl.BlockSpec((1, hid_p), lambda i: (0, 0)),
                    pl.BlockSpec((hid_p, out_p), lambda i: (0, 0)),
                    pl.BlockSpec((1, out_p), lambda i: (0, 0)),
                ],
                out_specs=pl.BlockSpec((tile_n, out_p), lambda i: (i, 0)),
            ),
            compiler_params=pltpu.CompilerParams(
                dimension_semantics=("parallel",),
                vmem_limit_bytes=vmem_limit,
            ),
        )(x2d, w1_p, b1_p, w2_p, b2_p)

    return out2d[:n, :out_dim].reshape(batch, seq, out_dim)


# --------------------------------------------------------------------------------------
# Reference + demo
# --------------------------------------------------------------------------------------
def init_linear_params(key, fan_in, fan_out, dtype=jnp.float32):
    """Deterministic nn.Linear-style init: U(-1/sqrt(fan_in), 1/sqrt(fan_in))."""
    kw, kb = jax.random.split(key)
    bound = 1.0 / jnp.sqrt(fan_in)
    # Stored as [fan_in, fan_out] (transposed vs torch's [out, in]).
    w = jax.random.uniform(kw, (fan_in, fan_out), dtype, -bound, bound)
    b = jax.random.uniform(kb, (1, fan_out), dtype, -bound, bound)
    return w, b


def _mlp_reference(x, w1, b1, w2, b2):
    """Pure-JAX reference (exact GELU, matching nn.GELU(approximate='none'))."""
    b, s, in_dim = x.shape
    h = x.reshape(-1, in_dim) @ w1 + b1
    h = 0.5 * h * (1.0 + lax.erf(h * _INV_SQRT2))
    return (h @ w2 + b2).reshape(b, s, w2.shape[1])


if __name__ == "__main__":
    # --- Small shapes consistent with the module (out_dim=None -> in_dim). ---
    batch, seq = 2, 8
    in_dim, hidden_dim = 32, 64
    out_dim = in_dim

    key = jax.random.PRNGKey(0)
    kx, k1, k2 = jax.random.split(key, 3)

    x = jax.random.normal(kx, (batch, seq, in_dim), jnp.float32)
    w1, b1 = init_linear_params(k1, in_dim, hidden_dim)
    w2, b2 = init_linear_params(k2, hidden_dim, out_dim)

    ref = _mlp_reference(x, w1, b1, w2, b2)

    # f32 compute path (fully-resident weight kernel): exact parity with the reference.
    out_f32 = jax.block_until_ready(
        mlp_forward(x, w1, b1, w2, b2, compute_dtype=jnp.float32))
    assert out_f32.shape == ref.shape
    assert jnp.allclose(out_f32, ref, atol=1e-5, rtol=1e-5), "f32 mismatch vs reference"

    # Default bf16 fast path (f32 MXU accumulation): loose tolerance.
    out_bf16 = jax.block_until_ready(mlp_forward(x, w1, b1, w2, b2))
    assert jnp.allclose(out_bf16, ref, atol=5e-2, rtol=5e-2), "bf16 mismatch vs reference"

    # Optional tanh-approx GELU (EUP tanh instead of the VPU erf polynomial).
    out_tanh = jax.block_until_ready(
        mlp_forward(x, w1, b1, w2, b2, compute_dtype=jnp.float32, gelu_tanh_approx=True))
    assert jnp.allclose(out_tanh, ref, atol=5e-2, rtol=5e-2), "tanh-gelu mismatch"

    # Exercise the streamed (hidden-reduction) path on a slightly larger problem by
    # explicitly requesting tile_h < hidden.
    B2, S2, I2, H2 = 2, 64, 128, 512
    kx2, k3, k4 = jax.random.split(jax.random.PRNGKey(1), 3)
    x2 = jax.random.normal(kx2, (B2, S2, I2), jnp.float32)
    w1b, b1b = init_linear_params(k3, I2, H2)
    w2b, b2b = init_linear_params(k4, H2, I2)
    ref2 = _mlp_reference(x2, w1b, b1b, w2b, b2b)
    out2 = jax.block_until_ready(
        mlp_forward(x2, w1b, b1b, w2b, b2b, tile_h=256, compute_dtype=jnp.float32))
    assert jnp.allclose(out2, ref2, atol=1e-4, rtol=1e-4), "streamed-path mismatch"

    print("KERNEL_OK")
</pallas_src>

<mosaic_0001>
module attributes {stable_mosaic.version = 11 : i64} {
  func.func @_mlp_kernel_resident(%arg0: i32, %arg1: memref<128x128xf32, #tpu.memory_space<vmem>>, %arg2: memref<128x128xf32, #tpu.memory_space<vmem>>, %arg3: memref<1x128xf32, #tpu.memory_space<vmem>>, %arg4: memref<128x128xf32, #tpu.memory_space<vmem>>, %arg5: memref<1x128xf32, #tpu.memory_space<vmem>>, %arg6: memref<128x128xf32, #tpu.memory_space<vmem>>) attributes {dimension_semantics = [#tpu.dimension_semantics<parallel>], iteration_bounds = array<i64: 1>, scalar_prefetch = 0 : i64, scratch_operands = 0 : i64, tpu.core_type = #tpu.core_type<tc>, window_params = [{transform_indices = @transform_0, window_bounds = array<i64: 128, 128>}, {pipeline_mode = #tpu.pipeline_mode<synchronous>, transform_indices = @transform_1, window_bounds = array<i64: 128, 128>}, {pipeline_mode = #tpu.pipeline_mode<synchronous>, transform_indices = @transform_2, window_bounds = array<i64: 1, 128>}, {pipeline_mode = #tpu.pipeline_mode<synchronous>, transform_indices = @transform_3, window_bounds = array<i64: 128, 128>}, {pipeline_mode = #tpu.pipeline_mode<synchronous>, transform_indices = @transform_4, window_bounds = array<i64: 1, 128>}, {transform_indices = @transform_5, window_bounds = array<i64: 128, 128>}]} {
    %c0 = arith.constant 0 : index
    %c0_0 = arith.constant 0 : index
    %0 = vector.load %arg1[%c0, %c0_0] : memref<128x128xf32, #tpu.memory_space<vmem>>, vector<128x128xf32>
    %c0_1 = arith.constant 0 : index
    %c0_2 = arith.constant 0 : index
    %1 = vector.load %arg2[%c0_1, %c0_2] : memref<128x128xf32, #tpu.memory_space<vmem>>, vector<128x128xf32>
    %cst = arith.constant dense<0.000000e+00> : vector<128x128xf32>
    %2 = tpu.matmul %0, %1, %cst {dimension_numbers = #tpu.dot_dimension_numbers<[1], [0], [0], [1], [0, 0, 1, 1], [], []>} : vector<128x128xf32>, vector<128x128xf32>, vector<128x128xf32> -> vector<128x128xf32>
    %c0_3 = arith.constant 0 : index
    %c0_4 = arith.constant 0 : index
    %3 = vector.load %arg3[%c0_3, %c0_4] : memref<1x128xf32, #tpu.memory_space<vmem>>, vector<1x128xf32>
    %4 = vector.broadcast %3 : vector<1x128xf32> to vector<128x128xf32>
    %5 = arith.addf %2, %4 : vector<128x128xf32>
    %cst_5 = arith.constant 5.000000e-01 : f32
    %6 = vector.broadcast %cst_5 : f32 to vector<128x128xf32>
    %7 = arith.mulf %6, %5 : vector<128x128xf32>
    %cst_6 = arith.constant 0.707106769 : f32
    %8 = vector.broadcast %cst_6 : f32 to vector<128x128xf32>
    %9 = arith.mulf %5, %8 : vector<128x128xf32>
    %10 = math.erf %9 : vector<128x128xf32>
    %cst_7 = arith.constant 1.000000e+00 : f32
    %11 = vector.broadcast %cst_7 : f32 to vector<128x128xf32>
    %12 = arith.addf %11, %10 : vector<128x128xf32>
    %13 = arith.mulf %7, %12 : vector<128x128xf32>
    %c0_8 = arith.constant 0 : index
    %c0_9 = arith.constant 0 : index
    %14 = vector.load %arg4[%c0_8, %c0_9] : memref<128x128xf32, #tpu.memory_space<vmem>>, vector<128x128xf32>
    %cst_10 = arith.constant dense<0.000000e+00> : vector<128x128xf32>
    %15 = tpu.matmul %13, %14, %cst_10 {dimension_numbers = #tpu.dot_dimension_numbers<[1], [0], [0], [1], [0, 0, 1, 1], [], []>} : vector<128x128xf32>, vector<128x128xf32>, vector<128x128xf32> -> vector<128x128xf32>
    %c0_11 = arith.constant 0 : index
    %c0_12 = arith.constant 0 : index
    %16 = vector.load %arg5[%c0_11, %c0_12] : memref<1x128xf32, #tpu.memory_space<vmem>>, vector<1x128xf32>
    %17 = vector.broadcast %16 : vector<1x128xf32> to vector<128x128xf32>
    %18 = arith.addf %15, %17 : vector<128x128xf32>
    %c0_13 = arith.constant 0 : index
    %c0_14 = arith.constant 0 : index
    %19 = vector.load %arg6[%c0_13, %c0_14] : memref<128x128xf32, #tpu.memory_space<vmem>>, vector<128x128xf32>
    tpu.vector_store %arg6[%c0_13, %c0_14], %18 {strides = array<i32>} : memref<128x128xf32, #tpu.memory_space<vmem>>, vector<128x128xf32>,
    return
  }
  func.func @transform_0(%arg0: i32) -> (i32, i32) {
    %c0_i32 = arith.constant 0 : i32
    %c0_i32_0 = arith.constant 0 : i32
    return %arg0, %c0_i32 : i32, i32
  }
  func.func @transform_1(%arg0: i32) -> (i32, i32) {
    %c0_i32 = arith.constant 0 : i32
    %c0_i32_0 = arith.constant 0 : i32
    %c0_i32_1 = arith.constant 0 : i32
    return %c0_i32, %c0_i32_0 : i32, i32
  }
  func.func @transform_2(%arg0: i32) -> (i32, i32) {
    %c0_i32 = arith.constant 0 : i32
    %c0_i32_0 = arith.constant 0 : i32
    %c0_i32_1 = arith.constant 0 : i32
    return %c0_i32, %c0_i32_0 : i32, i32
  }
  func.func @transform_3(%arg0: i32) -> (i32, i32) {
    %c0_i32 = arith.constant 0 : i32
    %c0_i32_0 = arith.constant 0 : i32
    %c0_i32_1 = arith.constant 0 : i32
    return %c0_i32, %c0_i32_0 : i32, i32
  }
  func.func @transform_4(%arg0: i32) -> (i32, i32) {
    %c0_i32 = arith.constant 0 : i32
    %c0_i32_0 = arith.constant 0 : i32
    %c0_i32_1 = arith.constant 0 : i32
    return %c0_i32, %c0_i32_0 : i32, i32
  }
  func.func @transform_5(%arg0: i32) -> (i32, i32) {
    %c0_i32 = arith.constant 0 : i32
    %c0_i32_0 = arith.constant 0 : i32
    return %arg0, %c0_i32 : i32, i32
  }
}

</mosaic_0001>

<llo_original>
// kernel: mlp_forward.1
$region0: #{mlp_forward.1}
  #allocation0 [shape = 'u32[]', space=smem, size = 0x4, offset = 0x4, fixed_abs, tag = 'smem constant byte address 0x4 - core index']
  #allocation1 [shape = 'u32[144,128]{1,0:T(1,128)}', space=vmem, size = 0x12000, scoped, tag = 'internal scratch']
  %s0 = inlined_call_operand.vmem [shape: f32[128,128], index: 0, kind: input, shape index: {}]
  %s1 = inlined_call_operand.vmem [shape: f32[128,128], index: 1, kind: input, shape index: {}]
  %s2 = inlined_call_operand.vmem [shape: f32[1,128], index: 2, kind: input, shape index: {}]
  %s3 = inlined_call_operand.vmem [shape: f32[128,128], index: 3, kind: input, shape index: {}]
  %s4 = inlined_call_operand.vmem [shape: f32[1,128], index: 4, kind: input, shape index: {}]
  %s5 = inlined_call_operand.vmem [shape: f32[128,128], index: 5, kind: output, shape index: {}]
  %s6 = sld [smem:[#allocation0]]
  $region30: #{mlp_forward.1} parent=0
    _
  %s8 = ssub.s32 1, %s6
  %s9 = scalar_select 0, %s8, %s6
  // Predicated region
  $region2: #{mlp_forward.1} parent=0 // pred_check
    _
  $region3: #{mlp_forward.1} parent=0 // pred_check_branch
    %11 = sbr.rel (0) target = $region5
  $region4: #{mlp_forward.1} parent=0 // pred_region
    _
  $region5: #{mlp_forward.1} parent=0 // pred_fallthru
    _
  // Predicated region
  $region6: #{mlp_forward.1} parent=0 // pred_check
    _
  $region7: #{mlp_forward.1} parent=0 // pred_check_branch
    %13 = sbr.rel (0) target = $region9
  $region8: #{mlp_forward.1} parent=0 // pred_region
    _
  $region9: #{mlp_forward.1} parent=0 // pred_fallthru
    _
  // Predicated region
  $region10: #{mlp_forward.1} parent=0 // pred_check
    _
  $region11: #{mlp_forward.1} parent=0 // pred_check_branch
    %15 = sbr.rel (0) target = $region13
  $region12: #{mlp_forward.1} parent=0 // pred_region
    _
  $region13: #{mlp_forward.1} parent=0 // pred_fallthru
    _
  // Predicated region
  $region14: #{mlp_forward.1} parent=0 // pred_check
    _
  $region15: #{mlp_forward.1} parent=0 // pred_check_branch
    %17 = sbr.rel (0) target = $region17
  $region16: #{mlp_forward.1} parent=0 // pred_region
    _
  $region17: #{mlp_forward.1} parent=0 // pred_fallthru
    _
  // Predicated region
  $region18: #{mlp_forward.1} parent=0 // pred_check
    _
  $region19: #{mlp_forward.1} parent=0 // pred_check_branch
    %19 = sbr.rel (0) target = $region21
  $region20: #{mlp_forward.1} parent=0 // pred_region
    _
  $region21: #{mlp_forward.1} parent=0 // pred_fallthru
    _
  %v20 = vld [vmem:[%s0] sm:$0xff]
  %v21 = vld [vmem:[%s0 + $0x8] sm:$0xff]
  %v22 = vld [vmem:[%s0 + $0x10] sm:$0xff]
  %v23 = vld [vmem:[%s0 + $0x18] sm:$0xff]
  %v24 = vld [vmem:[%s0 + $0x20] sm:$0xff]
  %v25 = vld [vmem:[%s0 + $0x28] sm:$0xff]
  %v26 = vld [vmem:[%s0 + $0x30] sm:$0xff]
  %v27 = vld [vmem:[%s0 + $0x38] sm:$0xff]
  %v28 = vld [vmem:[%s0 + $0x40] sm:$0xff]
  %v29 = vld [vmem:[%s0 + $0x48] sm:$0xff]
  %v30 = vld [vmem:[%s0 + $0x50] sm:$0xff]
  %v31 = vld [vmem:[%s0 + $0x58] sm:$0xff]
  %v32 = vld [vmem:[%s0 + $0x60] sm:$0xff]
  %v33 = vld [vmem:[%s0 + $0x68] sm:$0xff]
  %v34 = vld [vmem:[%s0 + $0x70] sm:$0xff]
  %v35 = vld [vmem:[%s0 + $0x78] sm:$0xff]
  %v36 = vld [vmem:[%s1] sm:$0xff]
  %v37 = vld [vmem:[%s1 + $0x8] sm:$0xff]
  %v38 = vld [vmem:[%s1 + $0x10] sm:$0xff]
  %v39 = vld [vmem:[%s1 + $0x18] sm:$0xff]
  %v40 = vld [vmem:[%s1 + $0x20] sm:$0xff]
  %v41 = vld [vmem:[%s1 + $0x28] sm:$0xff]
  %v42 = vld [vmem:[%s1 + $0x30] sm:$0xff]
  %v43 = vld [vmem:[%s1 + $0x38] sm:$0xff]
  %v44 = vld [vmem:[%s1 + $0x40] sm:$0xff]
  %v45 = vld [vmem:[%s1 + $0x48] sm:$0xff]
  %v46 = vld [vmem:[%s1 + $0x50] sm:$0xff]
  %v47 = vld [vmem:[%s1 + $0x58] sm:$0xff]
  %v48 = vld [vmem:[%s1 + $0x60] sm:$0xff]
  %v49 = vld [vmem:[%s1 + $0x68] sm:$0xff]
  %v50 = vld [vmem:[%s1 + $0x70] sm:$0xff]
  %v51 = vld [vmem:[%s1 + $0x78] sm:$0xff]
  %v52 = vld [vmem:[%s2] sm:$0x1]
  %v54 = vlaneseq
  %v55 = vshrl.u32 %v54, 7
  %v56 = vsub.s32 0, %v55
  %v57 = vrot.slane %v52, %v56
  %59 = vmatprep.subr.mxu0 0.0
  %60 = vmatpush1.msra.mxu0 %v36
  %61 = vmatprep.subr.mxu0 0.0
  %62 = vmatpush1.msra.mxu0 %v37
  %63 = vmatprep.subr.mxu0 0.0
  %64 = vmatpush1.msra.mxu0 %v38
  %65 = vmatprep.subr.mxu0 0.0
  %66 = vmatpush1.msra.mxu0 %v39
  %67 = vmatprep.subr.mxu0 0.0
  %68 = vmatpush1.msra.mxu0 %v40
  %69 = vmatprep.subr.mxu0 0.0
  %70 = vmatpush1.msra.mxu0 %v41
  %71 = vmatprep.subr.mxu0 0.0
  %72 = vmatpush1.msra.mxu0 %v42
  %73 = vmatprep.subr.mxu0 0.0
  %74 = vmatpush1.msra.mxu0 %v43
  %75 = vmatprep.subr.mxu0 0.0
  %76 = vmatpush1.msra.mxu0 %v44
  %77 = vmatprep.subr.mxu0 0.0
  %78 = vmatpush1.msra.mxu0 %v45
  %79 = vmatprep.subr.mxu0 0.0
  %80 = vmatpush1.msra.mxu0 %v46
  %81 = vmatprep.subr.mxu0 0.0
  %82 = vmatpush1.msra.mxu0 %v47
  %83 = vmatprep.subr.mxu0 0.0
  %84 = vmatpush1.msra.mxu0 %v48
  %85 = vmatprep.subr.mxu0 0.0
  %86 = vmatpush1.msra.mxu0 %v49
  %87 = vmatprep.subr.mxu0 0.0
  %88 = vmatpush1.msra.mxu0 %v50
  %89 = vmatprep.subr.mxu0 0.0
  %90 = vmatpush1.msra.mxu0 %v51
  %91 = vmatprep.subr.mxu0 0.0
  %92 = vmatpush1.msra.mxu0 0.0
  %93 = vmatprep.subr.mxu0 0.0
  %94 = vmatpush1.msra.mxu0 0.0
  %95 = vmatprep.subr.mxu0 0.0
  %96 = vmatpush1.msra.mxu0 0.0
  %97 = vmatprep.subr.mxu0 0.0
  %98 = vmatpush1.msra.mxu0 0.0
  %99 = vmatprep.subr.mxu0 0.0
  %100 = vmatpush1.msra.mxu0 0.0
  %101 = vmatprep.subr.mxu0 0.0
  %102 = vmatpush1.msra.mxu0 0.0
  %103 = vmatprep.subr.mxu0 0.0
  %104 = vmatpush1.msra.mxu0 0.0
  %105 = vmatprep.subr.mxu0 0.0
  %106 = vmatpush1.msra.mxu0 0.0
  %107 = vmatprep.subr.mxu0 0.0
  %108 = vmatpush1.msra.mxu0 0.0
  %109 = vmatprep.subr.mxu0 0.0
  %110 = vmatpush1.msra.mxu0 0.0
  %111 = vmatprep.subr.mxu0 0.0
  %112 = vmatpush1.msra.mxu0 0.0
  %113 = vmatprep.subr.mxu0 0.0
  %114 = vmatpush1.msra.mxu0 0.0
  %115 = vmatprep.subr.mxu0 0.0
  %116 = vmatpush1.msra.mxu0 0.0
  %117 = vmatprep.subr.mxu0 0.0
  %118 = vmatpush1.msra.mxu0 0.0
  %119 = vmatprep.subr.mxu0 0.0
  %120 = vmatpush1.msra.mxu0 0.0
  %121 = vmatprep.subr.mxu0 0.0
  %122 = vmatpush1.msra.mxu0 0.0
  %123 = vmatprep.mubr.f32.mxu0 0.0
  %124 = vmatmul.mubr.f32.gmra.mrb[0].mxu0 %v20
  %v125 = vpop.f32.mrb[0].mxu0
  %v126 = vadd.f32 %v57, %v125
  %v127 = vpop.f32.mrb[0].mxu0
  %128 = vmatprep.mubr.f32.mxu0 0.0
  %129 = vmatmul.mubr.f32.gmra.mrb[0].mxu0 %v21
  %v130 = vpop.f32.mrb[0].mxu0
  %v131 = vadd.f32 %v57, %v130
  %v132 = vpop.f32.mrb[0].mxu0
  %133 = vmatprep.mubr.f32.mxu0 0.0
  %134 = vmatmul.mubr.f32.gmra.mrb[0].mxu0 %v22
  %v135 = vpop.f32.mrb[0].mxu0
  %v136 = vadd.f32 %v57, %v135
  %v137 = vpop.f32.mrb[0].mxu0
  %138 = vmatprep.mubr.f32.mxu0 0.0
  %139 = vmatmul.mubr.f32.gmra.mrb[0].mxu0 %v23
  %v140 = vpop.f32.mrb[0].mxu0
  %v141 = vadd.f32 %v57, %v140
  %v142 = vpop.f32.mrb[0].mxu0
  %143 = vmatprep.mubr.f32.mxu0 0.0
  %144 = vmatmul.mubr.f32.gmra.mrb[0].mxu0 %v24
  %v145 = vpop.f32.mrb[0].mxu0
  %v146 = vadd.f32 %v57, %v145
  %v147 = vpop.f32.mrb[0].mxu0
  %148 = vmatprep.mubr.f32.mxu0 0.0
  %149 = vmatmul.mubr.f32.gmra.mrb[0].mxu0 %v25
  %v150 = vpop.f32.mrb[0].mxu0
  %v151 = vadd.f32 %v57, %v150
  %v152 = vpop.f32.mrb[0].mxu0
  %153 = vmatprep.mubr.f32.mxu0 0.0
  %154 = vmatmul.mubr.f32.gmra.mrb[0].mxu0 %v26
  %v155 = vpop.f32.mrb[0].mxu0
  %v156 = vadd.f32 %v57, %v155
  %v157 = vpop.f32.mrb[0].mxu0
  %158 = vmatprep.mubr.f32.mxu0 0.0
  %159 = vmatmul.mubr.f32.gmra.mrb[0].mxu0 %v27
  %v160 = vpop.f32.mrb[0].mxu0
  %v161 = vadd.f32 %v57, %v160
  %v162 = vpop.f32.mrb[0].mxu0
  %163 = vmatprep.mubr.f32.mxu0 0.0
  %164 = vmatmul.mubr.f32.gmra.mrb[0].mxu0 %v28
  %v165 = vpop.f32.mrb[0].mxu0
  %v166 = vadd.f32 %v57, %v165
  %v167 = vpop.f32.mrb[0].mxu0
  %168 = vmatprep.mubr.f32.mxu0 0.0
  %169 = vmatmul.mubr.f32.gmra.mrb[0].mxu0 %v29
  %v170 = vpop.f32.mrb[0].mxu0
  %v171 = vadd.f32 %v57, %v170
  %v172 = vpop.f32.mrb[0].mxu0
  %173 = vmatprep.mubr.f32.mxu0 0.0
  %174 = vmatmul.mubr.f32.gmra.mrb[0].mxu0 %v30
  %v175 = vpop.f32.mrb[0].mxu0
  %v176 = vadd.f32 %v57, %v175
  %v177 = vpop.f32.mrb[0].mxu0
  %178 = vmatprep.mubr.f32.mxu0 0.0
  %179 = vmatmul.mubr.f32.gmra.mrb[0].mxu0 %v31
  %v180 = vpop.f32.mrb[0].mxu0
  %v181 = vadd.f32 %v57, %v180
  %v182 = vpop.f32.mrb[0].mxu0
  %183 = vmatprep.mubr.f32.mxu0 0.0
  %184 = vmatmul.mubr.f32.gmra.mrb[0].mxu0 %v32
  %v185 = vpop.f32.mrb[0].mxu0
  %v186 = vadd.f32 %v57, %v185
  %v187 = vpop.f32.mrb[0].mxu0
  %188 = vmatprep.mubr.f32.mxu0 0.0
  %189 = vmatmul.mubr.f32.gmra.mrb[0].mxu0 %v33
  %v190 = vpop.f32.mrb[0].mxu0
  %v191 = vadd.f32 %v57, %v190
  %v192 = vpop.f32.mrb[0].mxu0
  %193 = vmatprep.mubr.f32.mxu0 0.0
  %194 = vmatmul.mubr.f32.gmra.mrb[0].mxu0 %v34
  %v195 = vpop.f32.mrb[0].mxu0
  %v196 = vadd.f32 %v57, %v195
  %v197 = vpop.f32.mrb[0].mxu0
  %198 = vmatprep.mubr.f32.mxu0 0.0
  %199 = vmatmul.mubr.f32.gmra.mrb[0].mxu0 %v35
  %v200 = vpop.f32.mrb[0].mxu0
  %v201 = vadd.f32 %v57, %v200
  %v202 = vpop.f32.mrb[0].mxu0
  %203 = vdwg.mxu0
  %v204 = vmul.f32 %v126, 0.5
  %v205 = vmul.f32 %v131, 0.5
  %v206 = vmul.f32 %v136, 0.5
  %v207 = vmul.f32 %v141, 0.5
  %v208 = vmul.f32 %v146, 0.5
  %v209 = vmul.f32 %v151, 0.5
  %v210 = vmul.f32 %v156, 0.5
  %v211 = vmul.f32 %v161, 0.5
  %v212 = vmul.f32 %v166, 0.5
  %v213 = vmul.f32 %v171, 0.5
  %v214 = vmul.f32 %v176, 0.5
  %v215 = vmul.f32 %v181, 0.5
  %v216 = vmul.f32 %v186, 0.5
  %v217 = vmul.f32 %v191, 0.5
  %v218 = vmul.f32 %v196, 0.5
  %v219 = vmul.f32 %v201, 0.5
  %v220 = vmul.f32 %v126, 0.70710677
  %v221 = vmul.f32 %v131, 0.70710677
  %v222 = vmul.f32 %v136, 0.70710677
  %v223 = vmul.f32 %v141, 0.70710677
  %v224 = vmul.f32 %v146, 0.70710677
  %v225 = vmul.f32 %v151, 0.70710677
  %v226 = vmul.f32 %v156, 0.70710677
  %v227 = vmul.f32 %v161, 0.70710677
  %v228 = vmul.f32 %v166, 0.70710677
  %v229 = vmul.f32 %v171, 0.70710677
  %v230 = vmul.f32 %v176, 0.70710677
  %v231 = vmul.f32 %v181, 0.70710677
  %v232 = vmul.f32 %v186, 0.70710677
  %v233 = vmul.f32 %v191, 0.70710677
  %v234 = vmul.f32 %v196, 0.70710677
  %v235 = vmul.f32 %v201, 0.70710677
  %v236 = verf.f32.pop %v220
  %v237 = verf.f32.pop %v221
  %v238 = verf.f32.pop %v222
  %v239 = verf.f32.pop %v223
  %v240 = verf.f32.pop %v224
  %v241 = verf.f32.pop %v225
  %v242 = verf.f32.pop %v226
  %v243 = verf.f32.pop %v227
  %v244 = verf.f32.pop %v228
  %v245 = verf.f32.pop %v229
  %v246 = verf.f32.pop %v230
  %v247 = verf.f32.pop %v231
  %v248 = verf.f32.pop %v232
  %v249 = verf.f32.pop %v233
  %v250 = verf.f32.pop %v234
  %v251 = verf.f32.pop %v235
  %v252 = vadd.f32 %v236, 1.0
  %v253 = vadd.f32 %v237, 1.0
  %v254 = vadd.f32 %v238, 1.0
  %v255 = vadd.f32 %v239, 1.0
  %v256 = vadd.f32 %v240, 1.0
  %v257 = vadd.f32 %v241, 1.0
  %v258 = vadd.f32 %v242, 1.0
  %v259 = vadd.f32 %v243, 1.0
  %v260 = vadd.f32 %v244, 1.0
  %v261 = vadd.f32 %v245, 1.0
  %v262 = vadd.f32 %v246, 1.0
  %v263 = vadd.f32 %v247, 1.0
  %v264 = vadd.f32 %v248, 1.0
  %v265 = vadd.f32 %v249, 1.0
  %v266 = vadd.f32 %v250, 1.0
  %v267 = vadd.f32 %v251, 1.0
  %v268 = vmul.f32 %v204, %v252
  %v269 = vmul.f32 %v205, %v253
  %v270 = vmul.f32 %v206, %v254
  %v271 = vmul.f32 %v207, %v255
  %v272 = vmul.f32 %v208, %v256
  %v273 = vmul.f32 %v209, %v257
  %v274 = vmul.f32 %v210, %v258
  %v275 = vmul.f32 %v211, %v259
  %v276 = vmul.f32 %v212, %v260
  %v277 = vmul.f32 %v213, %v261
  %v278 = vmul.f32 %v214, %v262
  %v279 = vmul.f32 %v215, %v263
  %v280 = vmul.f32 %v216, %v264
  %v281 = vmul.f32 %v217, %v265
  %v282 = vmul.f32 %v218, %v266
  %v283 = vmul.f32 %v219, %v267
  %v284 = vld [vmem:[%s3] sm:$0xff]
  %v285 = vld [vmem:[%s3 + $0x8] sm:$0xff]
  %v286 = vld [vmem:[%s3 + $0x10] sm:$0xff]
  %v287 = vld [vmem:[%s3 + $0x18] sm:$0xff]
  %v288 = vld [vmem:[%s3 + $0x20] sm:$0xff]
  %v289 = vld [vmem:[%s3 + $0x28] sm:$0xff]
  %v290 = vld [vmem:[%s3 + $0x30] sm:$0xff]
  %v291 = vld [vmem:[%s3 + $0x38] sm:$0xff]
  %v292 = vld [vmem:[%s3 + $0x40] sm:$0xff]
  %v293 = vld [vmem:[%s3 + $0x48] sm:$0xff]
  %v294 = vld [vmem:[%s3 + $0x50] sm:$0xff]
  %v295 = vld [vmem:[%s3 + $0x58] sm:$0xff]
  %v296 = vld [vmem:[%s3 + $0x60] sm:$0xff]
  %v297 = vld [vmem:[%s3 + $0x68] sm:$0xff]
  %v298 = vld [vmem:[%s3 + $0x70] sm:$0xff]
  %v299 = vld [vmem:[%s3 + $0x78] sm:$0xff]
  %v300 = vld [vmem:[%s4] sm:$0x1]
  %v302 = vlaneseq
  %v303 = vshrl.u32 %v302, 7
  %v304 = vsub.s32 0, %v303
  %v305 = vrot.slane %v300, %v304
  %307 = vmatprep.subr.mxu0 0.0
  %308 = vmatpush1.msra.mxu0 %v284
  %309 = vmatprep.subr.mxu0 0.0
  %310 = vmatpush1.msra.mxu0 %v285
  %311 = vmatprep.subr.mxu0 0.0
  %312 = vmatpush1.msra.mxu0 %v286
  %313 = vmatprep.subr.mxu0 0.0
  %314 = vmatpush1.msra.mxu0 %v287
  %315 = vmatprep.subr.mxu0 0.0
  %316 = vmatpush1.msra.mxu0 %v288
  %317 = vmatprep.subr.mxu0 0.0
  %318 = vmatpush1.msra.mxu0 %v289
  %319 = vmatprep.subr.mxu0 0.0
  %320 = vmatpush1.msra.mxu0 %v290
  %321 = vmatprep.subr.mxu0 0.0
  %322 = vmatpush1.msra.mxu0 %v291
  %323 = vmatprep.subr.mxu0 0.0
  %324 = vmatpush1.msra.mxu0 %v292
  %325 = vmatprep.subr.mxu0 0.0
  %326 = vmatpush1.msra.mxu0 %v293
  %327 = vmatprep.subr.mxu0 0.0
  %328 = vmatpush1.msra.mxu0 %v294
  %329 = vmatprep.subr.mxu0 0.0
  %330 = vmatpush1.msra.mxu0 %v295
  %331 = vmatprep.subr.mxu0 0.0
  %332 = vmatpush1.msra.mxu0 %v296
  %333 = vmatprep.subr.mxu0 0.0
  %334 = vmatpush1.msra.mxu0 %v297
  %335 = vmatprep.subr.mxu0 0.0
  %336 = vmatpush1.msra.mxu0 %v298
  %337 = vmatprep.subr.mxu0 0.0
  %338 = vmatpush1.msra.mxu0 %v299
  %339 = vmatprep.subr.mxu0 0.0
  %340 = vmatpush1.msra.mxu0 0.0
  %341 = vmatprep.subr.mxu0 0.0
  %342 = vmatpush1.msra.mxu0 0.0
  %343 = vmatprep.subr.mxu0 0.0
  %344 = vmatpush1.msra.mxu0 0.0
  %345 = vmatprep.subr.mxu0 0.0
  %346 = vmatpush1.msra.mxu0 0.0
  %347 = vmatprep.subr.mxu0 0.0
  %348 = vmatpush1.msra.mxu0 0.0
  %349 = vmatprep.subr.mxu0 0.0
  %350 = vmatpush1.msra.mxu0 0.0
  %351 = vmatprep.subr.mxu0 0.0
  %352 = vmatpush1.msra.mxu0 0.0
  %353 = vmatprep.subr.mxu0 0.0
  %354 = vmatpush1.msra.mxu0 0.0
  %355 = vmatprep.subr.mxu0 0.0
  %356 = vmatpush1.msra.mxu0 0.0
  %357 = vmatprep.subr.mxu0 0.0
  %358 = vmatpush1.msra.mxu0 0.0
  %359 = vmatprep.subr.mxu0 0.0
  %360 = vmatpush1.msra.mxu0 0.0
  %361 = vmatprep.subr.mxu0 0.0
  %362 = vmatpush1.msra.mxu0 0.0
  %363 = vmatprep.subr.mxu0 0.0
  %364 = vmatpush1.msra.mxu0 0.0
  %365 = vmatprep.subr.mxu0 0.0
  %366 = vmatpush1.msra.mxu0 0.0
  %367 = vmatprep.subr.mxu0 0.0
  %368 = vmatpush1.msra.mxu0 0.0
  %369 = vmatprep.subr.mxu0 0.0
  %370 = vmatpush1.msra.mxu0 0.0
  %371 = vmatprep.mubr.f32.mxu0 0.0
  %372 = vmatmul.mubr.f32.gmra.mrb[0].mxu0 %v268
  %v373 = vpop.f32.mrb[0].mxu0
  %v374 = vadd.f32 %v305, %v373
  %v375 = vpop.f32.mrb[0].mxu0
  %376 = vmatprep.mubr.f32.mxu0 0.0
  %377 = vmatmul.mubr.f32.gmra.mrb[0].mxu0 %v269
  %v378 = vpop.f32.mrb[0].mxu0
  %v379 = vadd.f32 %v305, %v378
  %v380 = vpop.f32.mrb[0].mxu0
  %381 = vmatprep.mubr.f32.mxu0 0.0
  %382 = vmatmul.mubr.f32.gmra.mrb[0].mxu0 %v270
  %v383 = vpop.f32.mrb[0].mxu0
  %v384 = vadd.f32 %v305, %v383
  %v385 = vpop.f32.mrb[0].mxu0
  %386 = vmatprep.mubr.f32.mxu0 0.0
  %387 = vmatmul.mubr.f32.gmra.mrb[0].mxu0 %v271
  %v388 = vpop.f32.mrb[0].mxu0
  %v389 = vadd.f32 %v305, %v388
  %v390 = vpop.f32.mrb[0].mxu0
  %391 = vmatprep.mubr.f32.mxu0 0.0
  %392 = vmatmul.mubr.f32.gmra.mrb[0].mxu0 %v272
  %v393 = vpop.f32.mrb[0].mxu0
  %v394 = vadd.f32 %v305, %v393
  %v395 = vpop.f32.mrb[0].mxu0
  %396 = vmatprep.mubr.f32.mxu0 0.0
  %397 = vmatmul.mubr.f32.gmra.mrb[0].mxu0 %v273
  %v398 = vpop.f32.mrb[0].mxu0
  %v399 = vadd.f32 %v305, %v398
  %v400 = vpop.f32.mrb[0].mxu0
  %401 = vmatprep.mubr.f32.mxu0 0.0
  %402 = vmatmul.mubr.f32.gmra.mrb[0].mxu0 %v274
  %v403 = vpop.f32.mrb[0].mxu0
  %v404 = vadd.f32 %v305, %v403
  %v405 = vpop.f32.mrb[0].mxu0
  %406 = vmatprep.mubr.f32.mxu0 0.0
  %407 = vmatmul.mubr.f32.gmra.mrb[0].mxu0 %v275
  %v408 = vpop.f32.mrb[0].mxu0
  %v409 = vadd.f32 %v305, %v408
  %v410 = vpop.f32.mrb[0].mxu0
  %411 = vmatprep.mubr.f32.mxu0 0.0
  %412 = vmatmul.mubr.f32.gmra.mrb[0].mxu0 %v276
  %v413 = vpop.f32.mrb[0].mxu0
  %v414 = vadd.f32 %v305, %v413
  %v415 = vpop.f32.mrb[0].mxu0
  %416 = vmatprep.mubr.f32.mxu0 0.0
  %417 = vmatmul.mubr.f32.gmra.mrb[0].mxu0 %v277
  %v418 = vpop.f32.mrb[0].mxu0
  %v419 = vadd.f32 %v305, %v418
  %v420 = vpop.f32.mrb[0].mxu0
  %421 = vmatprep.mubr.f32.mxu0 0.0
  %422 = vmatmul.mubr.f32.gmra.mrb[0].mxu0 %v278
  %v423 = vpop.f32.mrb[0].mxu0
  %v424 = vadd.f32 %v305, %v423
  %v425 = vpop.f32.mrb[0].mxu0
  %426 = vmatprep.mubr.f32.mxu0 0.0
  %427 = vmatmul.mubr.f32.gmra.mrb[0].mxu0 %v279
  %v428 = vpop.f32.mrb[0].mxu0
  %v429 = vadd.f32 %v305, %v428
  %v430 = vpop.f32.mrb[0].mxu0
  %431 = vmatprep.mubr.f32.mxu0 0.0
  %432 = vmatmul.mubr.f32.gmra.mrb[0].mxu0 %v280
  %v433 = vpop.f32.mrb[0].mxu0
  %v434 = vadd.f32 %v305, %v433
  %v435 = vpop.f32.mrb[0].mxu0
  %436 = vmatprep.mubr.f32.mxu0 0.0
  %437 = vmatmul.mubr.f32.gmra.mrb[0].mxu0 %v281
  %v438 = vpop.f32.mrb[0].mxu0
  %v439 = vadd.f32 %v305, %v438
  %v440 = vpop.f32.mrb[0].mxu0
  %441 = vmatprep.mubr.f32.mxu0 0.0
  %442 = vmatmul.mubr.f32.gmra.mrb[0].mxu0 %v282
  %v443 = vpop.f32.mrb[0].mxu0
  %v444 = vadd.f32 %v305, %v443
  %v445 = vpop.f32.mrb[0].mxu0
  %446 = vmatprep.mubr.f32.mxu0 0.0
  %447 = vmatmul.mubr.f32.gmra.mrb[0].mxu0 %v283
  %v448 = vpop.f32.mrb[0].mxu0
  %v449 = vadd.f32 %v305, %v448
  %v450 = vpop.f32.mrb[0].mxu0
  %451 = vdwg.mxu0
  %452 = vst [vmem:[%s5] sm:$0xff] %v374
  %453 = vst [vmem:[%s5 + $0x8] sm:$0xff] %v379
  %454 = vst [vmem:[%s5 + $0x10] sm:$0xff] %v384
  %455 = vst [vmem:[%s5 + $0x18] sm:$0xff] %v389
  %456 = vst [vmem:[%s5 + $0x20] sm:$0xff] %v394
  %457 = vst [vmem:[%s5 + $0x28] sm:$0xff] %v399
  %458 = vst [vmem:[%s5 + $0x30] sm:$0xff] %v404
  %459 = vst [vmem:[%s5 + $0x38] sm:$0xff] %v409
  %460 = vst [vmem:[%s5 + $0x40] sm:$0xff] %v414
  %461 = vst [vmem:[%s5 + $0x48] sm:$0xff] %v419
  %462 = vst [vmem:[%s5 + $0x50] sm:$0xff] %v424
  %463 = vst [vmem:[%s5 + $0x58] sm:$0xff] %v429
  %464 = vst [vmem:[%s5 + $0x60] sm:$0xff] %v434
  %465 = vst [vmem:[%s5 + $0x68] sm:$0xff] %v439
  %466 = vst [vmem:[%s5 + $0x70] sm:$0xff] %v444
  %467 = vst [vmem:[%s5 + $0x78] sm:$0xff] %v449
  // Predicated region
  $region22: #{mlp_forward.1} parent=0 // pred_check
    _
  $region23: #{mlp_forward.1} parent=0 // pred_check_branch
    %469 = sbr.rel (0) target = $region25
  $region24: #{mlp_forward.1} parent=0 // pred_region
    _
  $region25: #{mlp_forward.1} parent=0 // pred_fallthru
    _
  // Predicated region
  $region26: #{mlp_forward.1} parent=0 // pred_check
    _
  $region27: #{mlp_forward.1} parent=0 // pred_check_branch
    %471 = sbr.rel (0) target = $region29
  $region28: #{mlp_forward.1} parent=0 // pred_region
    _
  $region29: #{mlp_forward.1} parent=0 // pred_fallthru
    _

</llo_original>
